<compile_context>
chip_gen: v6e
topology: v6e:2x2x1
jax: 0.10.0
libtpu: 0.0.40
codegen_flags: <defaults>
</compile_context>

<pallas_src>
import math

import jax
import jax.numpy as jnp
from jax.experimental import pallas as pl
from jax.experimental.pallas import tpu as pltpu


def build_pe(channel: int, joint_num: int, time_len: int, domain: str) -> jnp.ndarray:
    """Deterministic construction of the positional-encoding buffer (plain JAX glue)."""
    if domain == "temporal":
        pos = jnp.repeat(jnp.arange(time_len), joint_num)          # t per (t, j)
    elif domain == "spatial":
        pos = jnp.tile(jnp.arange(joint_num), time_len)            # j per (t, j)
    else:
        raise ValueError("domain must be 'temporal' or 'spatial'")
    position = pos.astype(jnp.float32)[:, None]                    # (T*J, 1)
    div_term = jnp.exp(
        jnp.arange(0, channel, 2).astype(jnp.float32) * -(math.log(10000.0) / channel)
    )                                                              # (channel//2,)
    pe = jnp.zeros((time_len * joint_num, channel), jnp.float32)
    pe = pe.at[:, 0::2].set(jnp.sin(position * div_term))
    pe = pe.at[:, 1::2].set(jnp.cos(position * div_term))
    # (T*J, C) -> (T, J, C) -> (C, T, J) -> (1, C, T, J)
    pe = pe.reshape(time_len, joint_num, channel).transpose(2, 0, 1)[None]
    return pe


def _add_pe_kernel(x_ref, pe_ref, o_ref):
    # Elementwise VPU add; pe block is (1, cols) and broadcasts over sublanes.
    o_ref[...] = x_ref[...] + pe_ref[...]


def _pick_tile(extent: int, unit: int, cap: int) -> int:
    """Largest legal tile: full extent if it fits the cap, else a multiple of `unit`."""
    if extent <= cap:
        return extent                 # block == full dim is always legal
    return (cap // unit) * unit       # multiple of the hardware unit; grid uses cdiv


def positional_encoding_forward(x: jnp.ndarray, pe: jnp.ndarray) -> jnp.ndarray:
    """x: (N, C, T, J) float32; pe: (1, C, time_len, J). Returns x + pe[:, :, :T]."""
    n, c, t, j = x.shape
    pe_sliced = pe[:, :, :t, :]                     # matches self.pe[:, :, :x.size(2)]

    # Lane-dense 2-D views: last dim carries C*T*J (contiguous in row-major NCTJ).
    f = c * t * j
    x2 = x.reshape(n, f)
    pe2 = pe_sliced.reshape(1, f)

    # Tile budget: rows up to 512 (sublane unit 8), cols up to 2048 (lane unit 128).
    # Worst case x/out block = 512*2048*4 B = 4 MiB; double-buffered in/out ~16 MiB,
    # well inside the 32 MiB scoped VMEM on v5e/v6e/v7x.
    row_tile = _pick_tile(n, 8, 512)
    col_tile = _pick_tile(f, 128, 2048)
    grid = (pl.cdiv(n, row_tile), pl.cdiv(f, col_tile))

    out2 = pl.pallas_call(
        _add_pe_kernel,
        out_shape=jax.ShapeDtypeStruct((n, f), x.dtype),
        grid_spec=pl.GridSpec(
            grid=grid,
            in_specs=[
                pl.BlockSpec((row_tile, col_tile), lambda i, jj: (i, jj)),
                # pe is grid-invariant along the row axis -> not re-DMA'd per row tile.
                pl.BlockSpec((1, col_tile), lambda i, jj: (0, jj)),
            ],
            out_specs=pl.BlockSpec((row_tile, col_tile), lambda i, jj: (i, jj)),
        ),
        compiler_params=pltpu.CompilerParams(
            dimension_semantics=("parallel", "parallel"),
        ),
    )(x2, pe2)

    return out2.reshape(n, c, t, j)


if __name__ == "__main__":
    # Small shapes consistent with the module: channel=4, joint_num=8, time_len=16.
    channel, joint_num, time_len = 4, 8, 16
    batch, t_in = 2, 12  # x's time dim <= time_len, exercises the pe slice

    pe = build_pe(channel, joint_num, time_len, domain="spatial")

    key = jax.random.PRNGKey(0)
    x = jax.random.normal(key, (batch, channel, t_in, joint_num), dtype=jnp.float32)

    out = positional_encoding_forward(x, pe)
    out = jax.block_until_ready(out)

    # Sanity check against pure-JAX reference.
    ref = x + pe[:, :, :t_in, :]
    assert out.shape == x.shape
    assert jnp.allclose(out, ref, atol=1e-6), "mismatch vs reference"

    print("KERNEL_OK")
</pallas_src>

<mosaic_0001>
module attributes {stable_mosaic.version = 11 : i64} {
  func.func @_add_pe_kernel(%arg0: i32, %arg1: i32, %arg2: memref<2x384xf32, #tpu.memory_space<vmem>>, %arg3: memref<1x384xf32, #tpu.memory_space<vmem>>, %arg4: memref<2x384xf32, #tpu.memory_space<vmem>>) attributes {dimension_semantics = [#tpu.dimension_semantics<parallel>, #tpu.dimension_semantics<parallel>], iteration_bounds = array<i64: 1, 1>, scalar_prefetch = 0 : i64, scratch_operands = 0 : i64, tpu.core_type = #tpu.core_type<tc>, window_params = [{transform_indices = @transform_0, window_bounds = array<i64: 2, 384>}, {transform_indices = @transform_1, window_bounds = array<i64: 1, 384>}, {transform_indices = @transform_2, window_bounds = array<i64: 2, 384>}]} {
    %c0 = arith.constant 0 : index
    %c0_0 = arith.constant 0 : index
    %0 = vector.load %arg2[%c0, %c0_0] : memref<2x384xf32, #tpu.memory_space<vmem>>, vector<2x384xf32>
    %c0_1 = arith.constant 0 : index
    %c0_2 = arith.constant 0 : index
    %1 = vector.load %arg3[%c0_1, %c0_2] : memref<1x384xf32, #tpu.memory_space<vmem>>, vector<1x384xf32>
    %2 = vector.broadcast %1 : vector<1x384xf32> to vector<2x384xf32>
    %3 = arith.addf %0, %2 : vector<2x384xf32>
    %c0_3 = arith.constant 0 : index
    %c0_4 = arith.constant 0 : index
    %4 = vector.load %arg4[%c0_3, %c0_4] : memref<2x384xf32, #tpu.memory_space<vmem>>, vector<2x384xf32>
    tpu.vector_store %arg4[%c0_3, %c0_4], %3 {strides = array<i32>} : memref<2x384xf32, #tpu.memory_space<vmem>>, vector<2x384xf32>,
    return
  }
  func.func @transform_0(%arg0: i32, %arg1: i32) -> (i32, i32) {
    %c0_i32 = arith.constant 0 : i32
    return %arg0, %arg1 : i32, i32
  }
  func.func @transform_1(%arg0: i32, %arg1: i32) -> (i32, i32) {
    %c0_i32 = arith.constant 0 : i32
    %c0_i32_0 = arith.constant 0 : i32
    return %c0_i32, %arg1 : i32, i32
  }
  func.func @transform_2(%arg0: i32, %arg1: i32) -> (i32, i32) {
    %c0_i32 = arith.constant 0 : i32
    return %arg0, %arg1 : i32, i32
  }
}

</mosaic_0001>

<llo_original>
// kernel: tpu_custom_call.1
$region0: #{tpu_custom_call.1}
  #allocation0 [shape = 'u32[]', space=smem, size = 0x4, offset = 0x4, fixed_abs, tag = 'smem constant byte address 0x4 - core index']
  #allocation1 [shape = 'u32[144,128]{1,0:T(1,128)}', space=vmem, size = 0x12000, scoped, tag = 'internal scratch']
  %s0 = inlined_call_operand.hbm [shape: f32[2,384], index: 0, kind: input, shape index: {}]
  %s1 = inlined_call_operand.hbm [shape: f32[1,384], index: 1, kind: input, shape index: {}]
  %s2 = inlined_call_operand.hbm [shape: f32[2,384], index: 2, kind: output, shape index: {}]
  %s3 = sld [smem:[#allocation0]]
  $region26: #{tpu_custom_call.1} parent=0
    _
  %s5 = ssub.s32 1, %s3
  %s6 = scalar_select 0, %s5, %s3
  $region1: #{tpu_custom_call.1} parent=0
    #allocation2 [shape = 'u8[3072]{0}', space=vmem, size = 0xc00, scoped, tag = 'input window, operand 0, single buffered']
    #allocation3 [shape = 's32[1]{0}', space=sflag, size = 0x4, scoped, tag = 'scoped memory for tpu_custom_call.1']
    #allocation4 [shape = 's32[1]{0}', space=sflag, size = 0x4, scoped, tag = 'scoped memory for tpu_custom_call.1']
    #allocation5 [shape = 'u8[1536]{0}', space=vmem, size = 0x800, scoped, tag = 'input window, operand 1, single buffered']
    #allocation6 [shape = 's32[1]{0}', space=sflag, size = 0x4, scoped, tag = 'scoped memory for tpu_custom_call.1']
    #allocation7 [shape = 'u8[3072]{0}', space=vmem, size = 0xc00, scoped, tag = 'output window, operand 0, single buffered']
    %7 = vsyncpa [#allocation3], 0
    %8 = vsyncpa [#allocation6], 0
    %9 = vsyncpa [#allocation4], 0
    // Predicated region
    $region2: #{tpu_custom_call.1} parent=1 // pred_check
      _
    $region3: #{tpu_custom_call.1} parent=1 // pred_check_branch
      %11 = sbr.rel (0) target = $region5
    $region4: #{tpu_custom_call.1} parent=1 // pred_region
      %s13 = ssub.s32 96, 96
      %14 = vsyncadd [#allocation3], %s13
      %s16 = sshll.u32 [#allocation2], 4
      %s17 = int_to_ptr.vmem [resolvable:$true] %s16
      %19 = dma.hbm_to_vmem [thread:$0]  %s0, 96, %s17, [#allocation3]
    $region5: #{tpu_custom_call.1} parent=1 // pred_fallthru
      _
    // Predicated region
    $region6: #{tpu_custom_call.1} parent=1 // pred_check
      _
    $region7: #{tpu_custom_call.1} parent=1 // pred_check_branch
      %21 = sbr.rel (0) target = $region9
    $region8: #{tpu_custom_call.1} parent=1 // pred_region
      %s23 = ssub.s32 48, 48
      %24 = vsyncadd [#allocation6], %s23
      %s26 = sshll.u32 [#allocation5], 4
      %s27 = int_to_ptr.vmem [resolvable:$true] %s26
      %29 = dma.hbm_to_vmem [thread:$0]  %s1, 48, %s27, [#allocation6]
    $region9: #{tpu_custom_call.1} parent=1 // pred_fallthru
      _
    // Predicated region
    $region10: #{tpu_custom_call.1} parent=1 // pred_check
      _
    $region11: #{tpu_custom_call.1} parent=1 // pred_check_branch
      %31 = sbr.rel (0) target = $region13
    $region12: #{tpu_custom_call.1} parent=1 // pred_region
      %32 = dma.done [#allocation3], 96
    $region13: #{tpu_custom_call.1} parent=1 // pred_fallthru
      _
    // Predicated region
    $region14: #{tpu_custom_call.1} parent=1 // pred_check
      _
    $region15: #{tpu_custom_call.1} parent=1 // pred_check_branch
      %34 = sbr.rel (0) target = $region17
    $region16: #{tpu_custom_call.1} parent=1 // pred_region
      %35 = dma.done [#allocation6], 48
    $region17: #{tpu_custom_call.1} parent=1 // pred_fallthru
      _
    %v36 = vld [vmem:[#allocation2] sm:$0x3f]
    %v37 = vld [vmem:[#allocation5] sm:$0x7]
    %v39 = vlaneseq
    %v40 = vshrl.u32 %v39, 7
    %v41 = vsub.s32 0, %v40
    %v42 = vrot.slane %v37, %v41
    %v43 = vlaneseq
    %v44 = vshrl.u32 %v43, 7
    %v45 = vsub.s32 1, %v44
    %v46 = vrot.slane %v37, %v45
    %v47 = vlaneseq
    %v48 = vshrl.u32 %v47, 7
    %v49 = vsub.s32 2, %v48
    %v50 = vrot.slane %v37, %v49
    %v51 = vcombine.low %v42, %v46
    %v53 = vunpack.c.l.s4 1983009808
    %v54 = vunpack.c.0.s8 %v53
    %v55 = vlaneseq
    %v56 = vshrl.u32 %v55, 7
    %v57 = vsub.s32 %v54, %v56
    %v58 = vrot.slane %v51, %v57
    %v60 = vunpack.c.l.s4 1983009808
    %v61 = vunpack.c.0.s8 %v60
    %v62 = vlaneseq
    %v63 = vshrl.u32 %v62, 7
    %v64 = vsub.s32 %v61, %v63
    %v65 = vrot.slane %v50, %v64
    %v66 = vcombine.low %v58, %v65
    %v68 = vadd.f32 %v36, %v66
    %69 = vst [vmem:[#allocation7] sm:$0x3f] %v68
    // Predicated region
    $region18: #{tpu_custom_call.1} parent=1 // pred_check
      _
    $region19: #{tpu_custom_call.1} parent=1 // pred_check_branch
      %71 = sbr.rel (0) target = $region21
    $region20: #{tpu_custom_call.1} parent=1 // pred_region
      %s73 = ssub.s32 96, 96
      %74 = vsyncadd [#allocation4], %s73
      %s76 = sshll.u32 [#allocation7], 4
      %s77 = int_to_ptr.vmem [resolvable:$true] %s76
      %79 = dma.vmem_to_hbm [thread:$0]  %s77, 96, %s2, [#allocation4]
    $region21: #{tpu_custom_call.1} parent=1 // pred_fallthru
      _
    // Predicated region
    $region22: #{tpu_custom_call.1} parent=1 // pred_check
      _
    $region23: #{tpu_custom_call.1} parent=1 // pred_check_branch
      %81 = sbr.rel (0) target = $region25
    $region24: #{tpu_custom_call.1} parent=1 // pred_region
      %82 = dma.done [#allocation4], 96
    $region25: #{tpu_custom_call.1} parent=1 // pred_fallthru
      _
    %83 = vsyncpa [#allocation3], 1
    %84 = vsyncpa [#allocation6], 1
    %85 = vsyncpa [#allocation4], 1

</llo_original>
